<compile_context>
chip_gen: v7x
topology: tpu7x:2x2x1
jax: 0.10.0
libtpu: 0.0.40
codegen_flags: <defaults>
</compile_context>

<pallas_src>
import numpy as np
import jax
import jax.numpy as jnp
from jax.experimental import pallas as pl
from jax.experimental.pallas import tpu as pltpu


# ~2 MiB per block -> with in+out double-buffered ~8 MiB VMEM: fits every
# generation's default scoped VMEM (16 MiB v5e, 32 MiB v6e/v7x) and keeps the
# ~0.35 us per-grid-step overhead well under the per-step HBM time.
_MAX_BLOCK_BYTES = 2 * 1024 * 1024


def _sublane_min(dtype):
    """Minimum sublane multiple for a dtype: f32 -> 8, bf16 -> 16, int8/fp8 -> 32."""
    itemsize = jnp.dtype(dtype).itemsize
    return max(8, 32 // max(int(itemsize), 1))


def _identity_kernel(x_ref, o_ref):
    o_ref[...] = x_ref[...]


def pallas_identity_copy(x):
    """Materialize a copy of `x` with a lane-dense Pallas identity kernel.

    No pad/slice round trips: the array is viewed exactly as (rows, D) where
    D is the trailing dim, and only the row axis is tiled.
    """
    orig_shape = x.shape
    dtype = x.dtype
    itemsize = int(jnp.dtype(dtype).itemsize)

    if x.ndim >= 2:
        d = int(orig_shape[-1])
        rows = int(np.prod(orig_shape[:-1]))
    else:
        d = int(orig_shape[-1]) if x.ndim == 1 else 1
        rows = 1
    x2d = x.reshape(rows, d)  # exact reshape, no padding

    sub = _sublane_min(dtype)
    total_bytes = rows * d * itemsize

    if rows <= sub or total_bytes <= _MAX_BLOCK_BYTES:
        # Single full-array block: block dims equal to the array dims, so no
        # (8,128) divisibility constraint and a single DMA pair.
        tm = rows
        grid = (1,)
    else:
        # Tile only the leading axis; tm is a multiple of the dtype's sublane
        # minimum and sized for ~2 MiB blocks.  Ragged last block (if any) is
        # masked by Pallas via the cdiv grid.
        tm = (_MAX_BLOCK_BYTES // max(d * itemsize, 1)) // sub * sub
        tm = max(sub, min(tm, (rows // sub) * sub))
        grid = (pl.cdiv(rows, tm),)

    out2d = pl.pallas_call(
        _identity_kernel,
        out_shape=jax.ShapeDtypeStruct((rows, d), dtype),
        grid=grid,
        in_specs=[pl.BlockSpec((tm, d), lambda i: (i, 0))],
        out_specs=pl.BlockSpec((tm, d), lambda i: (i, 0)),
        input_output_aliases={0: 0},
        compiler_params=pltpu.CompilerParams(
            dimension_semantics=("parallel",)),
        cost_estimate=pl.CostEstimate(
            flops=0, transcendentals=0, bytes_accessed=2 * total_bytes),
    )(x2d)

    return out2d.reshape(orig_shape)


class TrivialObjectifierPallas:
    """Pallas/JAX equivalent of agents.nets.TrivialObjectifier."""

    def __init__(self, dim, obj_encoder=None, nobj=1, materialize_copy=False):
        del obj_encoder          # unused, exactly like the PyTorch module
        self.nobj = nobj
        self.out_dim = dim
        self.materialize_copy = materialize_copy

    def __call__(self, vid_feat):
        # Static host-side shape check, mirroring the PyTorch `assert`.
        assert vid_feat.shape[2] == self.nobj, '{} != {}'.format(
            vid_feat.shape[2], self.nobj)
        if not self.materialize_copy:
            # Fastest correct implementation: the module is a pure pass-through.
            return vid_feat
        # Optional: produce a distinct output buffer via the Pallas kernel.
        return pallas_identity_copy(vid_feat)


if __name__ == "__main__":
    key = jax.random.PRNGKey(0)

    # vid_feat: (batch, time, nobj, feat_dim) — shape[2] must equal nobj.
    batch, time, nobj, dim = 2, 8, 1, 32
    vid_feat = jax.random.normal(key, (batch, time, nobj, dim), jnp.float32)

    # Default (recommended) path: pure pass-through, no kernel.
    objectifier = TrivialObjectifierPallas(dim=dim, obj_encoder=None, nobj=nobj)
    out_passthrough = objectifier(vid_feat)

    # Kernel path: run the Pallas identity copy once and block on it.
    objectifier_copy = TrivialObjectifierPallas(
        dim=dim, obj_encoder=None, nobj=nobj, materialize_copy=True)
    out_kernel = jax.block_until_ready(objectifier_copy(vid_feat))

    # Reference semantics: the module is an identity on vid_feat.
    assert out_passthrough.shape == vid_feat.shape
    assert out_kernel.shape == vid_feat.shape
    assert out_kernel.dtype == vid_feat.dtype
    np.testing.assert_array_equal(np.asarray(out_passthrough), np.asarray(vid_feat))
    np.testing.assert_array_equal(np.asarray(out_kernel), np.asarray(vid_feat))

    print("KERNEL_OK")
</pallas_src>

<mosaic_0001>
module attributes {stable_mosaic.version = 11 : i64} {
  func.func @_identity_kernel(%arg0: i32, %arg1: memref<16x32xf32, #tpu.memory_space<vmem>>, %arg2: memref<16x32xf32, #tpu.memory_space<vmem>>) attributes {dimension_semantics = [#tpu.dimension_semantics<parallel>], iteration_bounds = array<i64: 1>, scalar_prefetch = 0 : i64, scratch_operands = 0 : i64, tpu.core_type = #tpu.core_type<tc>, window_params = [{transform_indices = @transform_0, window_bounds = array<i64: 16, 32>}, {transform_indices = @transform_1, window_bounds = array<i64: 16, 32>}]} {
    %c0 = arith.constant 0 : index
    %c0_0 = arith.constant 0 : index
    %0 = vector.load %arg1[%c0, %c0_0] : memref<16x32xf32, #tpu.memory_space<vmem>>, vector<16x32xf32>
    %c0_1 = arith.constant 0 : index
    %c0_2 = arith.constant 0 : index
    %1 = vector.load %arg2[%c0_1, %c0_2] : memref<16x32xf32, #tpu.memory_space<vmem>>, vector<16x32xf32>
    tpu.vector_store %arg2[%c0_1, %c0_2], %0 {strides = array<i32>} : memref<16x32xf32, #tpu.memory_space<vmem>>, vector<16x32xf32>,
    return
  }
  func.func @transform_0(%arg0: i32) -> (i32, i32) {
    %c0_i32 = arith.constant 0 : i32
    %c0_i32_0 = arith.constant 0 : i32
    return %arg0, %c0_i32 : i32, i32
  }
  func.func @transform_1(%arg0: i32) -> (i32, i32) {
    %c0_i32 = arith.constant 0 : i32
    %c0_i32_0 = arith.constant 0 : i32
    return %arg0, %c0_i32 : i32, i32
  }
}

</mosaic_0001>

<llo_original>
// kernel: tpu_custom_call.1
$region0: #{tpu_custom_call.1}
  #allocation0 [shape = 'u32[]', space=smem, size = 0x4, offset = 0x4, fixed_abs, tag = 'smem constant byte address 0x4 - core index']
  #allocation1 [shape = 'u32[144,128]{1,0:T(1,128)}', space=vmem, size = 0x12000, scoped, tag = 'internal scratch']
  %s0 = inlined_call_operand.hbm [shape: f32[16,32], index: 0, kind: input, shape index: {}, may-alias: {0,1}]
  %s1 = inlined_call_operand.hbm [shape: f32[16,32], index: 1, kind: output, shape index: {}, may-alias: {0,1}]
  %s2 = sld [smem:[#allocation0]]
  $region18: #{tpu_custom_call.1} parent=0
    _
  %s4 = ssub.s32 1, %s2
  %s5 = scalar_select 0, %s4, %s2
  $region1: #{tpu_custom_call.1} parent=0
    #allocation2 [shape = 'u8[8192]{0}', space=vmem, size = 0x2000, scoped, tag = 'input window, operand 0, single buffered']
    #allocation3 [shape = 's32[1]{0}', space=sflag, size = 0x4, scoped, tag = 'scoped memory for tpu_custom_call.1']
    #allocation4 [shape = 's32[1]{0}', space=sflag, size = 0x4, scoped, tag = 'scoped memory for tpu_custom_call.1']
    #allocation5 [shape = 'u8[8192]{0}', space=vmem, size = 0x2000, scoped, tag = 'output window, operand 0, single buffered']
    %6 = vsyncpa [#allocation3], 0
    %7 = vsyncpa [#allocation4], 0
    // Predicated region
    $region2: #{tpu_custom_call.1} parent=1 // pred_check
      _
    $region3: #{tpu_custom_call.1} parent=1 // pred_check_branch
      %9 = sbr.rel (0) target = $region5
    $region4: #{tpu_custom_call.1} parent=1 // pred_region
      %s11 = ssub.s32 256, 256
      %12 = vsyncadd [#allocation3], %s11
      %s13 = sshll.u32 [#allocation2], 4
      %s14 = int_to_ptr.vmem [resolvable:$true] %s13
      %19 = dma.hbm_to_vmem [thread:$0]  %s0, 256, %s14, [#allocation3], 128, 128, 8
    $region5: #{tpu_custom_call.1} parent=1 // pred_fallthru
      _
    // Predicated region
    $region6: #{tpu_custom_call.1} parent=1 // pred_check
      _
    $region7: #{tpu_custom_call.1} parent=1 // pred_check_branch
      %21 = sbr.rel (0) target = $region9
    $region8: #{tpu_custom_call.1} parent=1 // pred_region
      %22 = dma.done [#allocation3], 256
    $region9: #{tpu_custom_call.1} parent=1 // pred_fallthru
      _
    %v23 = vld [vmem:[#allocation2] sm:$0xff]
    %v24 = vld [vmem:[#allocation2 + $0x8] sm:$0xff]
    %vm25 = vcmask 261120
    %26 = vst.msk [vmem:[#allocation5] sm:$0xff] %vm25, %v23
    %27 = vst.msk [vmem:[#allocation5 + $0x8] sm:$0xff] %vm25, %v24
    // Predicated region
    $region10: #{tpu_custom_call.1} parent=1 // pred_check
      _
    $region11: #{tpu_custom_call.1} parent=1 // pred_check_branch
      %29 = sbr.rel (0) target = $region13
    $region12: #{tpu_custom_call.1} parent=1 // pred_region
      %s31 = ssub.s32 256, 256
      %32 = vsyncadd [#allocation4], %s31
      %s33 = sshll.u32 [#allocation5], 4
      %s34 = int_to_ptr.vmem [resolvable:$true] %s33
      %39 = dma.vmem_to_hbm [thread:$0]  %s34, 256, %s1, [#allocation4], 128, 128, 8
    $region13: #{tpu_custom_call.1} parent=1 // pred_fallthru
      _
    // Predicated region
    $region14: #{tpu_custom_call.1} parent=1 // pred_check
      _
    $region15: #{tpu_custom_call.1} parent=1 // pred_check_branch
      %41 = sbr.rel (0) target = $region17
    $region16: #{tpu_custom_call.1} parent=1 // pred_region
      %42 = dma.done [#allocation4], 256
    $region17: #{tpu_custom_call.1} parent=1 // pred_fallthru
      _
    %43 = vsyncpa [#allocation3], 1
    %44 = vsyncpa [#allocation4], 1

</llo_original>
